<compile_context>
chip_gen: v7x
topology: tpu7x:2x2x1
jax: 0.10.0
libtpu: 0.0.40
codegen_flags: <defaults>
</compile_context>

<pallas_src>
import functools

import jax
import jax.numpy as jnp
from jax import lax
from jax.experimental import pallas as pl
from jax.experimental.pallas import tpu as pltpu

LEAKY_SLOPE = 0.15
LANE = 128


def _round_up(v, m):
    return ((v + m - 1) // m) * m


def _leaky_relu(v, slope=LEAKY_SLOPE):
    return jnp.where(v > 0, v, slope * v)


def conv_block_kernel(x_ref, w1_ref, b1_ref, w2_ref, b2_ref, wr_ref, br_ref,
                      o_ref, pool_scr, *, seq_len):
    # x_ref: (rows, Cin_p) where rows = (batches in this tile) * seq_len.
    x = x_ref[...]
    rows = x.shape[0]

    def conv3_same(v, w_ref, b_ref):
        # v: (rows, Cpi); w_ref: (3, Cpi, Cpo); b_ref: (1, Cpo)
        # Shifted taps via XLU roll + masking at per-sequence edges (zero
        # 'same' padding only at true sequence boundaries).
        pos = lax.broadcasted_iota(jnp.int32, v.shape, 0) % seq_len
        prev = jnp.where(pos == 0, 0.0, pltpu.roll(v, 1, axis=0))
        nxt = jnp.where(pos == seq_len - 1, 0.0, pltpu.roll(v, rows - 1, axis=0))
        y = (jnp.dot(prev, w_ref[0], preferred_element_type=jnp.float32)
             + jnp.dot(v, w_ref[1], preferred_element_type=jnp.float32)
             + jnp.dot(nxt, w_ref[2], preferred_element_type=jnp.float32))
        return y + b_ref[...]

    # Residual 1x1 conv == channel matmul (on pre-activation x).
    res = jnp.dot(x, wr_ref[...], preferred_element_type=jnp.float32) + br_ref[...]

    h = _leaky_relu(conv3_same(_leaky_relu(x), w1_ref, b1_ref))   # (rows, Cmid_p)
    y = conv3_same(h, w2_ref, b2_ref)                              # (rows, Cout_p)

    # Fused MaxPool1d(2,2) on both branches:
    #   s[i] = max(y[i], y[i+1]) + max(res[i], res[i+1])
    # Only even rows are read back, so the roll wrap at the last (odd) row never
    # leaks, and L even keeps each pooled pair inside one batch element.
    y_nxt = pltpu.roll(y, rows - 1, axis=0)
    r_nxt = pltpu.roll(res, rows - 1, axis=0)
    pool_scr[...] = jnp.maximum(y, y_nxt) + jnp.maximum(res, r_nxt)
    o_ref[...] = pool_scr[pl.ds(0, rows // 2, stride=2), :].astype(o_ref.dtype)


def _batches_per_tile(n, seq_len, target_rows=2048):
    """Whole batch elements per grid step, keeping per-step VMEM bounded."""
    nb = max(1, min(n, max(1, target_rows // max(seq_len, 1))))
    while n % nb:
        nb -= 1
    # Keep (8,128) block tiling legal on both the input (nb*L rows) and the
    # pooled output (nb*L//2 rows) blocks; otherwise cover everything in one tile.
    if nb < n and (nb * seq_len) % 16 != 0:
        nb = n
    return nb


def conv_block_forward(x_ncl, w1, b1, w2, b2, wr, br):
    """x_ncl: (N, Cin, L); weights in PyTorch Conv1d layout (out, in, k)."""
    N, Cin, L = x_ncl.shape
    assert L % 2 == 0, "MaxPool1d(2,2) path assumes even sequence length"
    Cmid = w1.shape[0]
    Cout = w2.shape[0]

    cin_p = _round_up(Cin, LANE)
    cmid_p = _round_up(Cmid, LANE)
    cout_p = _round_up(Cout, LANE)

    # NCL -> lane-padded row-major (N*L, Cin_p).
    # TODO(synk): accept NLC activations end-to-end to drop this transpose pair.
    x_rows = jnp.transpose(x_ncl, (0, 2, 1)).reshape(N * L, Cin)
    x_rows = jnp.pad(x_rows, ((0, 0), (0, cin_p - Cin)))

    # Conv weights -> (k, Cin_p, Cout_p) taps for channel-last matmuls.
    w1_k = jnp.pad(jnp.transpose(w1, (2, 1, 0)),
                   ((0, 0), (0, cin_p - Cin), (0, cmid_p - Cmid)))
    w2_k = jnp.pad(jnp.transpose(w2, (2, 1, 0)),
                   ((0, 0), (0, cmid_p - Cmid), (0, cout_p - Cout)))
    wr_k = jnp.pad(jnp.transpose(wr[:, :, 0], (1, 0)),
                   ((0, cin_p - Cin), (0, cout_p - Cout)))
    b1_k = jnp.pad(b1.reshape(1, Cmid), ((0, 0), (0, cmid_p - Cmid)))
    b2_k = jnp.pad(b2.reshape(1, Cout), ((0, 0), (0, cout_p - Cout)))
    br_k = jnp.pad(br.reshape(1, Cout), ((0, 0), (0, cout_p - Cout)))

    nb = _batches_per_tile(N, L)
    rows = nb * L
    out_rows = rows // 2
    num_tiles = N // nb

    kernel = functools.partial(conv_block_kernel, seq_len=L)

    out_flat = pl.pallas_call(
        kernel,
        out_shape=jax.ShapeDtypeStruct((N * L // 2, cout_p), x_ncl.dtype),
        grid_spec=pltpu.PrefetchScalarGridSpec(
            num_scalar_prefetch=0,
            grid=(num_tiles,),
            in_specs=[
                pl.BlockSpec((rows, cin_p), lambda t: (t, 0)),
                pl.BlockSpec((3, cin_p, cmid_p), lambda t: (0, 0, 0)),
                pl.BlockSpec((1, cmid_p), lambda t: (0, 0)),
                pl.BlockSpec((3, cmid_p, cout_p), lambda t: (0, 0, 0)),
                pl.BlockSpec((1, cout_p), lambda t: (0, 0)),
                pl.BlockSpec((cin_p, cout_p), lambda t: (0, 0)),
                pl.BlockSpec((1, cout_p), lambda t: (0, 0)),
            ],
            out_specs=pl.BlockSpec((out_rows, cout_p), lambda t: (t, 0)),
            scratch_shapes=[pltpu.VMEM((rows, cout_p), jnp.float32)],
        ),
        compiler_params=pltpu.CompilerParams(
            dimension_semantics=("parallel",),
            vmem_limit_bytes=32 * 1024 * 1024,
        ),
    )(x_rows, w1_k, b1_k, w2_k, b2_k, wr_k, br_k)

    # Strip lane padding, restore (N, Cout, L//2).
    out = out_flat[:, :Cout].reshape(N, L // 2, Cout)
    return jnp.transpose(out, (0, 2, 1))


def reference_forward(x, w1, b1, w2, b2, wr, br):
    """Pure-JAX reference replicating the PyTorch module (NCL layout)."""
    dn = ('NCH', 'OIH', 'NCH')
    res = lax.conv_general_dilated(x, wr, (1,), 'VALID',
                                   dimension_numbers=dn) + br[None, :, None]
    out = _leaky_relu(x)
    out = lax.conv_general_dilated(out, w1, (1,), [(1, 1)],
                                   dimension_numbers=dn) + b1[None, :, None]
    out = _leaky_relu(out)
    out = lax.conv_general_dilated(out, w2, (1,), [(1, 1)],
                                   dimension_numbers=dn) + b2[None, :, None]

    def pool(v):
        n, c, l = v.shape
        return jnp.max(v.reshape(n, c, l // 2, 2), axis=-1)

    return pool(out) + pool(res)


def _init_conv1d(key, out_ch, in_ch, k):
    # Deterministic init mimicking PyTorch's default uniform bounds.
    kw, kb = jax.random.split(key)
    bound = 1.0 / (in_ch * k) ** 0.5
    w = jax.random.uniform(kw, (out_ch, in_ch, k), jnp.float32, -bound, bound)
    b = jax.random.uniform(kb, (out_ch,), jnp.float32, -bound, bound)
    return w, b


if __name__ == "__main__":
    N, C_in, C_mid, C_out, L = 2, 4, 8, 8, 16

    key = jax.random.PRNGKey(0)
    kx, k1, k2, kr = jax.random.split(key, 4)

    x = jax.random.normal(kx, (N, C_in, L), jnp.float32)      # PyTorch NCL input
    w1, b1 = _init_conv1d(k1, C_mid, C_in, 3)                  # conv1
    w2, b2 = _init_conv1d(k2, C_out, C_mid, 3)                 # conv2
    wr, br = _init_conv1d(kr, C_out, C_in, 1)                  # residual 1x1 conv

    out = conv_block_forward(x, w1, b1, w2, b2, wr, br)
    out = jax.block_until_ready(out)

    ref = reference_forward(x, w1, b1, w2, b2, wr, br)
    assert out.shape == (N, C_out, L // 2), out.shape
    assert jnp.allclose(out, ref, atol=1e-5, rtol=1e-5), \
        f"max err {jnp.max(jnp.abs(out - ref))}"

    print("KERNEL_OK")
</pallas_src>

<mosaic_0001>
module attributes {stable_mosaic.version = 11 : i64} {
  func.func @conv_block_kernel(%arg0: i32, %arg1: memref<32x128xf32, #tpu.memory_space<vmem>>, %arg2: memref<3x128x128xf32, #tpu.memory_space<vmem>>, %arg3: memref<1x128xf32, #tpu.memory_space<vmem>>, %arg4: memref<3x128x128xf32, #tpu.memory_space<vmem>>, %arg5: memref<1x128xf32, #tpu.memory_space<vmem>>, %arg6: memref<128x128xf32, #tpu.memory_space<vmem>>, %arg7: memref<1x128xf32, #tpu.memory_space<vmem>>, %arg8: memref<16x128xf32, #tpu.memory_space<vmem>>, %arg9: memref<32x128xf32, #tpu.memory_space<vmem>>) attributes {dimension_semantics = [#tpu.dimension_semantics<parallel>], iteration_bounds = array<i64: 1>, scalar_prefetch = 0 : i64, scratch_operands = 1 : i64, tpu.core_type = #tpu.core_type<tc>, window_params = [{transform_indices = @transform_0, window_bounds = array<i64: 32, 128>}, {pipeline_mode = #tpu.pipeline_mode<synchronous>, transform_indices = @transform_1, window_bounds = array<i64: 3, 128, 128>}, {pipeline_mode = #tpu.pipeline_mode<synchronous>, transform_indices = @transform_2, window_bounds = array<i64: 1, 128>}, {pipeline_mode = #tpu.pipeline_mode<synchronous>, transform_indices = @transform_3, window_bounds = array<i64: 3, 128, 128>}, {pipeline_mode = #tpu.pipeline_mode<synchronous>, transform_indices = @transform_4, window_bounds = array<i64: 1, 128>}, {pipeline_mode = #tpu.pipeline_mode<synchronous>, transform_indices = @transform_5, window_bounds = array<i64: 128, 128>}, {pipeline_mode = #tpu.pipeline_mode<synchronous>, transform_indices = @transform_6, window_bounds = array<i64: 1, 128>}, {transform_indices = @transform_7, window_bounds = array<i64: 16, 128>}]} {
    %c0 = arith.constant 0 : index
    %c0_0 = arith.constant 0 : index
    %0 = vector.load %arg1[%c0, %c0_0] : memref<32x128xf32, #tpu.memory_space<vmem>>, vector<32x128xf32>
    %c0_1 = arith.constant 0 : index
    %c0_2 = arith.constant 0 : index
    %1 = vector.load %arg6[%c0_1, %c0_2] : memref<128x128xf32, #tpu.memory_space<vmem>>, vector<128x128xf32>
    %cst = arith.constant dense<0.000000e+00> : vector<32x128xf32>
    %2 = tpu.matmul %0, %1, %cst {dimension_numbers = #tpu.dot_dimension_numbers<[1], [0], [0], [1], [0, 0, 1, 1], [], []>} : vector<32x128xf32>, vector<128x128xf32>, vector<32x128xf32> -> vector<32x128xf32>
    %c0_3 = arith.constant 0 : index
    %c0_4 = arith.constant 0 : index
    %3 = vector.load %arg7[%c0_3, %c0_4] : memref<1x128xf32, #tpu.memory_space<vmem>>, vector<1x128xf32>
    %4 = vector.broadcast %3 : vector<1x128xf32> to vector<32x128xf32>
    %5 = arith.addf %2, %4 : vector<32x128xf32>
    %cst_5 = arith.constant 0.000000e+00 : f32
    %6 = vector.broadcast %cst_5 : f32 to vector<32x128xf32>
    %7 = arith.cmpf ogt, %0, %6 : vector<32x128xf32>
    %cst_6 = arith.constant 1.500000e-01 : f32
    %8 = vector.broadcast %cst_6 : f32 to vector<32x128xf32>
    %9 = arith.mulf %8, %0 : vector<32x128xf32>
    %10 = arith.select %7, %0, %9 : vector<32x128xi1>, vector<32x128xf32>
    %11 = tpu.iota {dimensions = array<i32: 0>} : vector<32x128xi32>
    %c16_i32 = arith.constant 16 : i32
    %c0_i32 = arith.constant 0 : i32
    %12 = arith.cmpi eq, %c16_i32, %c0_i32 : i32
    %c1_i32 = arith.constant 1 : i32
    %13 = arith.select %12, %c1_i32, %c16_i32 : i32
    %14 = vector.broadcast %13 : i32 to vector<32x128xi32>
    %15 = arith.remsi %11, %14 : vector<32x128xi32>
    %c0_i32_7 = arith.constant 0 : i32
    %16 = vector.broadcast %c0_i32_7 : i32 to vector<32x128xi32>
    %17 = arith.cmpi ne, %15, %16 : vector<32x128xi32>
    %c0_i32_8 = arith.constant 0 : i32
    %18 = vector.broadcast %c0_i32_8 : i32 to vector<32x128xi32>
    %19 = arith.cmpi slt, %15, %18 : vector<32x128xi32>
    %c0_i32_9 = arith.constant 0 : i32
    %20 = arith.cmpi slt, %13, %c0_i32_9 : i32
    %21 = vector.broadcast %20 : i1 to vector<32x128xi1>
    %22 = vector.broadcast %21 : vector<32x128xi1> to vector<32x128xi1>
    %23 = arith.xori %19, %22 : vector<32x128xi1>
    %24 = arith.andi %23, %17 : vector<32x128xi1>
    %25 = vector.broadcast %13 : i32 to vector<32x128xi32>
    %26 = arith.addi %15, %25 : vector<32x128xi32>
    %27 = arith.select %24, %26, %15 : vector<32x128xi1>, vector<32x128xi32>
    %c0_i32_10 = arith.constant 0 : i32
    %28 = vector.broadcast %c0_i32_10 : i32 to vector<32x128xi32>
    %29 = arith.cmpi eq, %27, %28 : vector<32x128xi32>
    %c1_i32_11 = arith.constant 1 : i32
    %30 = tpu.dynamic_rotate %10 by %c1_i32_11 dim 0 : vector<32x128xf32>, i32 -> vector<32x128xf32>
    %cst_12 = arith.constant 0.000000e+00 : f32
    %31 = vector.broadcast %cst_12 : f32 to vector<32x128xf32>
    %32 = arith.select %29, %31, %30 : vector<32x128xi1>, vector<32x128xf32>
    %c15_i32 = arith.constant 15 : i32
    %33 = vector.broadcast %c15_i32 : i32 to vector<32x128xi32>
    %34 = arith.cmpi eq, %27, %33 : vector<32x128xi32>
    %c31_i32 = arith.constant 31 : i32
    %35 = tpu.dynamic_rotate %10 by %c31_i32 dim 0 : vector<32x128xf32>, i32 -> vector<32x128xf32>
    %cst_13 = arith.constant 0.000000e+00 : f32
    %36 = vector.broadcast %cst_13 : f32 to vector<32x128xf32>
    %37 = arith.select %34, %36, %35 : vector<32x128xi1>, vector<32x128xf32>
    %c0_14 = arith.constant 0 : index
    %c0_15 = arith.constant 0 : index
    %c0_16 = arith.constant 0 : index
    %38 = vector.load %arg2[%c0_14, %c0_15, %c0_16] : memref<3x128x128xf32, #tpu.memory_space<vmem>>, vector<1x128x128xf32>
    %39 = vector.shape_cast %38 : vector<1x128x128xf32> to vector<128x128xf32>
    %cst_17 = arith.constant dense<0.000000e+00> : vector<32x128xf32>
    %40 = tpu.matmul %32, %39, %cst_17 {dimension_numbers = #tpu.dot_dimension_numbers<[1], [0], [0], [1], [0, 0, 1, 1], [], []>} : vector<32x128xf32>, vector<128x128xf32>, vector<32x128xf32> -> vector<32x128xf32>
    %c1 = arith.constant 1 : index
    %c0_18 = arith.constant 0 : index
    %c0_19 = arith.constant 0 : index
    %41 = vector.load %arg2[%c1, %c0_18, %c0_19] : memref<3x128x128xf32, #tpu.memory_space<vmem>>, vector<1x128x128xf32>
    %42 = vector.shape_cast %41 : vector<1x128x128xf32> to vector<128x128xf32>
    %cst_20 = arith.constant dense<0.000000e+00> : vector<32x128xf32>
    %43 = tpu.matmul %10, %42, %cst_20 {dimension_numbers = #tpu.dot_dimension_numbers<[1], [0], [0], [1], [0, 0, 1, 1], [], []>} : vector<32x128xf32>, vector<128x128xf32>, vector<32x128xf32> -> vector<32x128xf32>
    %44 = arith.addf %40, %43 : vector<32x128xf32>
    %c2 = arith.constant 2 : index
    %c0_21 = arith.constant 0 : index
    %c0_22 = arith.constant 0 : index
    %45 = vector.load %arg2[%c2, %c0_21, %c0_22] : memref<3x128x128xf32, #tpu.memory_space<vmem>>, vector<1x128x128xf32>
    %46 = vector.shape_cast %45 : vector<1x128x128xf32> to vector<128x128xf32>
    %cst_23 = arith.constant dense<0.000000e+00> : vector<32x128xf32>
    %47 = tpu.matmul %37, %46, %cst_23 {dimension_numbers = #tpu.dot_dimension_numbers<[1], [0], [0], [1], [0, 0, 1, 1], [], []>} : vector<32x128xf32>, vector<128x128xf32>, vector<32x128xf32> -> vector<32x128xf32>
    %48 = arith.addf %44, %47 : vector<32x128xf32>
    %c0_24 = arith.constant 0 : index
    %c0_25 = arith.constant 0 : index
    %49 = vector.load %arg3[%c0_24, %c0_25] : memref<1x128xf32, #tpu.memory_space<vmem>>, vector<1x128xf32>
    %50 = vector.broadcast %49 : vector<1x128xf32> to vector<32x128xf32>
    %51 = arith.addf %48, %50 : vector<32x128xf32>
    %cst_26 = arith.constant 0.000000e+00 : f32
    %52 = vector.broadcast %cst_26 : f32 to vector<32x128xf32>
    %53 = arith.cmpf ogt, %51, %52 : vector<32x128xf32>
    %cst_27 = arith.constant 1.500000e-01 : f32
    %54 = vector.broadcast %cst_27 : f32 to vector<32x128xf32>
    %55 = arith.mulf %54, %51 : vector<32x128xf32>
    %56 = arith.select %53, %51, %55 : vector<32x128xi1>, vector<32x128xf32>
    %57 = tpu.iota {dimensions = array<i32: 0>} : vector<32x128xi32>
    %c16_i32_28 = arith.constant 16 : i32
    %c0_i32_29 = arith.constant 0 : i32
    %58 = arith.cmpi eq, %c16_i32_28, %c0_i32_29 : i32
    %c1_i32_30 = arith.constant 1 : i32
    %59 = arith.select %58, %c1_i32_30, %c16_i32_28 : i32
    %60 = vector.broadcast %59 : i32 to vector<32x128xi32>
    %61 = arith.remsi %57, %60 : vector<32x128xi32>
    %c0_i32_31 = arith.constant 0 : i32
    %62 = vector.broadcast %c0_i32_31 : i32 to vector<32x128xi32>
    %63 = arith.cmpi ne, %61, %62 : vector<32x128xi32>
    %c0_i32_32 = arith.constant 0 : i32
    %64 = vector.broadcast %c0_i32_32 : i32 to vector<32x128xi32>
    %65 = arith.cmpi slt, %61, %64 : vector<32x128xi32>
    %c0_i32_33 = arith.constant 0 : i32
    %66 = arith.cmpi slt, %59, %c0_i32_33 : i32
    %67 = vector.broadcast %66 : i1 to vector<32x128xi1>
    %68 = vector.broadcast %67 : vector<32x128xi1> to vector<32x128xi1>
    %69 = arith.xori %65, %68 : vector<32x128xi1>
    %70 = arith.andi %69, %63 : vector<32x128xi1>
    %71 = vector.broadcast %59 : i32 to vector<32x128xi32>
    %72 = arith.addi %61, %71 : vector<32x128xi32>
    %73 = arith.select %70, %72, %61 : vector<32x128xi1>, vector<32x128xi32>
    %c0_i32_34 = arith.constant 0 : i32
    %74 = vector.broadcast %c0_i32_34 : i32 to vector<32x128xi32>
    %75 = arith.cmpi eq, %73, %74 : vector<32x128xi32>
    %c1_i32_35 = arith.constant 1 : i32
    %76 = tpu.dynamic_rotate %56 by %c1_i32_35 dim 0 : vector<32x128xf32>, i32 -> vector<32x128xf32>
    %cst_36 = arith.constant 0.000000e+00 : f32
    %77 = vector.broadcast %cst_36 : f32 to vector<32x128xf32>
    %78 = arith.select %75, %77, %76 : vector<32x128xi1>, vector<32x128xf32>
    %c15_i32_37 = arith.constant 15 : i32
    %79 = vector.broadcast %c15_i32_37 : i32 to vector<32x128xi32>
    %80 = arith.cmpi eq, %73, %79 : vector<32x128xi32>
    %c31_i32_38 = arith.constant 31 : i32
    %81 = tpu.dynamic_rotate %56 by %c31_i32_38 dim 0 : vector<32x128xf32>, i32 -> vector<32x128xf32>
    %cst_39 = arith.constant 0.000000e+00 : f32
    %82 = vector.broadcast %cst_39 : f32 to vector<32x128xf32>
    %83 = arith.select %80, %82, %81 : vector<32x128xi1>, vector<32x128xf32>
    %c0_40 = arith.constant 0 : index
    %c0_41 = arith.constant 0 : index
    %c0_42 = arith.constant 0 : index
    %84 = vector.load %arg4[%c0_40, %c0_41, %c0_42] : memref<3x128x128xf32, #tpu.memory_space<vmem>>, vector<1x128x128xf32>
    %85 = vector.shape_cast %84 : vector<1x128x128xf32> to vector<128x128xf32>
    %cst_43 = arith.constant dense<0.000000e+00> : vector<32x128xf32>
    %86 = tpu.matmul %78, %85, %cst_43 {dimension_numbers = #tpu.dot_dimension_numbers<[1], [0], [0], [1], [0, 0, 1, 1], [], []>} : vector<32x128xf32>, vector<128x128xf32>, vector<32x128xf32> -> vector<32x128xf32>
    %c1_44 = arith.constant 1 : index
    %c0_45 = arith.constant 0 : index
    %c0_46 = arith.constant 0 : index
    %87 = vector.load %arg4[%c1_44, %c0_45, %c0_46] : memref<3x128x128xf32, #tpu.memory_space<vmem>>, vector<1x128x128xf32>
    %88 = vector.shape_cast %87 : vector<1x128x128xf32> to vector<128x128xf32>
    %cst_47 = arith.constant dense<0.000000e+00> : vector<32x128xf32>
    %89 = tpu.matmul %56, %88, %cst_47 {dimension_numbers = #tpu.dot_dimension_numbers<[1], [0], [0], [1], [0, 0, 1, 1], [], []>} : vector<32x128xf32>, vector<128x128xf32>, vector<32x128xf32> -> vector<32x128xf32>
    %90 = arith.addf %86, %89 : vector<32x128xf32>
    %c2_48 = arith.constant 2 : index
    %c0_49 = arith.constant 0 : index
    %c0_50 = arith.constant 0 : index
    %91 = vector.load %arg4[%c2_48, %c0_49, %c0_50] : memref<3x128x128xf32, #tpu.memory_space<vmem>>, vector<1x128x128xf32>
    %92 = vector.shape_cast %91 : vector<1x128x128xf32> to vector<128x128xf32>
    %cst_51 = arith.constant dense<0.000000e+00> : vector<32x128xf32>
    %93 = tpu.matmul %83, %92, %cst_51 {dimension_numbers = #tpu.dot_dimension_numbers<[1], [0], [0], [1], [0, 0, 1, 1], [], []>} : vector<32x128xf32>, vector<128x128xf32>, vector<32x128xf32> -> vector<32x128xf32>
    %94 = arith.addf %90, %93 : vector<32x128xf32>
    %c0_52 = arith.constant 0 : index
    %c0_53 = arith.constant 0 : index
    %95 = vector.load %arg5[%c0_52, %c0_53] : memref<1x128xf32, #tpu.memory_space<vmem>>, vector<1x128xf32>
    %96 = vector.broadcast %95 : vector<1x128xf32> to vector<32x128xf32>
    %97 = arith.addf %94, %96 : vector<32x128xf32>
    %c31_i32_54 = arith.constant 31 : i32
    %98 = tpu.dynamic_rotate %97 by %c31_i32_54 dim 0 : vector<32x128xf32>, i32 -> vector<32x128xf32>
    %c31_i32_55 = arith.constant 31 : i32
    %99 = tpu.dynamic_rotate %5 by %c31_i32_55 dim 0 : vector<32x128xf32>, i32 -> vector<32x128xf32>
    %100 = arith.maximumf %97, %98 : vector<32x128xf32>
    %101 = arith.maximumf %5, %99 : vector<32x128xf32>
    %102 = arith.addf %100, %101 : vector<32x128xf32>
    %c0_56 = arith.constant 0 : index
    %c0_57 = arith.constant 0 : index
    %103 = vector.load %arg9[%c0_56, %c0_57] : memref<32x128xf32, #tpu.memory_space<vmem>>, vector<32x128xf32>
    tpu.vector_store %arg9[%c0_56, %c0_57], %102 {strides = array<i32>} : memref<32x128xf32, #tpu.memory_space<vmem>>, vector<32x128xf32>,
    %c0_58 = arith.constant 0 : index
    %c0_59 = arith.constant 0 : index
    %104 = tpu.strided_load %arg9[%c0_58, %c0_59] {strides = array<i32: 2, 1>} : memref<32x128xf32, #tpu.memory_space<vmem>>, vector<16x128xf32>
    %c0_60 = arith.constant 0 : index
    %c0_61 = arith.constant 0 : index
    %105 = vector.load %arg8[%c0_60, %c0_61] : memref<16x128xf32, #tpu.memory_space<vmem>>, vector<16x128xf32>
    tpu.vector_store %arg8[%c0_60, %c0_61], %104 {strides = array<i32>} : memref<16x128xf32, #tpu.memory_space<vmem>>, vector<16x128xf32>,
    return
  }
  func.func @transform_0(%arg0: i32) -> (i32, i32) {
    %c0_i32 = arith.constant 0 : i32
    %c0_i32_0 = arith.constant 0 : i32
    return %arg0, %c0_i32 : i32, i32
  }
  func.func @transform_1(%arg0: i32) -> (i32, i32, i32) {
    %c0_i32 = arith.constant 0 : i32
    %c0_i32_0 = arith.constant 0 : i32
    %c0_i32_1 = arith.constant 0 : i32
    %c0_i32_2 = arith.constant 0 : i32
    return %c0_i32, %c0_i32_0, %c0_i32_1 : i32, i32, i32
  }
  func.func @transform_2(%arg0: i32) -> (i32, i32) {
    %c0_i32 = arith.constant 0 : i32
    %c0_i32_0 = arith.constant 0 : i32
    %c0_i32_1 = arith.constant 0 : i32
    return %c0_i32, %c0_i32_0 : i32, i32
  }
  func.func @transform_3(%arg0: i32) -> (i32, i32, i32) {
    %c0_i32 = arith.constant 0 : i32
    %c0_i32_0 = arith.constant 0 : i32
    %c0_i32_1 = arith.constant 0 : i32
    %c0_i32_2 = arith.constant 0 : i32
    return %c0_i32, %c0_i32_0, %c0_i32_1 : i32, i32, i32
  }
  func.func @transform_4(%arg0: i32) -> (i32, i32) {
    %c0_i32 = arith.constant 0 : i32
    %c0_i32_0 = arith.constant 0 : i32
    %c0_i32_1 = arith.constant 0 : i32
    return %c0_i32, %c0_i32_0 : i32, i32
  }
  func.func @transform_5(%arg0: i32) -> (i32, i32) {
    %c0_i32 = arith.constant 0 : i32
    %c0_i32_0 = arith.constant 0 : i32
    %c0_i32_1 = arith.constant 0 : i32
    return %c0_i32, %c0_i32_0 : i32, i32
  }
  func.func @transform_6(%arg0: i32) -> (i32, i32) {
    %c0_i32 = arith.constant 0 : i32
    %c0_i32_0 = arith.constant 0 : i32
    %c0_i32_1 = arith.constant 0 : i32
    return %c0_i32, %c0_i32_0 : i32, i32
  }
  func.func @transform_7(%arg0: i32) -> (i32, i32) {
    %c0_i32 = arith.constant 0 : i32
    %c0_i32_0 = arith.constant 0 : i32
    return %arg0, %c0_i32 : i32, i32
  }
}

</mosaic_0001>

<llo_original>
// kernel: tpu_custom_call.1
$region0: #{tpu_custom_call.1}
  #allocation0 [shape = 'u32[]', space=smem, size = 0x4, offset = 0x4, fixed_abs, tag = 'smem constant byte address 0x4 - core index']
  #allocation1 [shape = 'u32[144,128]{1,0:T(1,128)}', space=vmem, size = 0x12000, scoped, tag = 'internal scratch']
  #allocation2 [shape = 'f32[32,128]{1,0:T(8,128)}', space=vmem, size = 0x4000, scoped, tag = 'scratch operand']
  %s0 = inlined_call_operand.hbm [shape: f32[32,128], index: 0, kind: input, shape index: {}]
  %s1 = inlined_call_operand.hbm [shape: f32[3,128,128], index: 1, kind: input, shape index: {}]
  %s2 = inlined_call_operand.vmem [shape: f32[1,128], index: 2, kind: input, shape index: {}]
  %s3 = inlined_call_operand.hbm [shape: f32[3,128,128], index: 3, kind: input, shape index: {}]
  %s4 = inlined_call_operand.vmem [shape: f32[1,128], index: 4, kind: input, shape index: {}]
  %s5 = inlined_call_operand.hbm [shape: f32[128,128], index: 5, kind: input, shape index: {}]
  %s6 = inlined_call_operand.vmem [shape: f32[1,128], index: 6, kind: input, shape index: {}]
  %s7 = inlined_call_operand.hbm [shape: f32[16,128], index: 7, kind: output, shape index: {}]
  %s8 = sld [smem:[#allocation0]]
  $region54: #{tpu_custom_call.1} parent=0
    _
  %s10 = ssub.s32 1, %s8
  %s11 = scalar_select 0, %s10, %s8
  $region1: #{tpu_custom_call.1} parent=0
    #allocation3 [shape = 'u8[16384]{0}', space=vmem, size = 0x4000, scoped, tag = 'input window, operand 0, single buffered']
    #allocation4 [shape = 's32[1]{0}', space=sflag, size = 0x4, scoped, tag = 'scoped memory for tpu_custom_call.1']
    #allocation5 [shape = 's32[1]{0}', space=sflag, size = 0x4, scoped, tag = 'scoped memory for tpu_custom_call.1']
    #allocation6 [shape = 'u8[196608]{0}', space=vmem, size = 0x30000, scoped, tag = 'input window, operand 1, single buffered']
    #allocation7 [shape = 's32[1]{0}', space=sflag, size = 0x4, scoped, tag = 'scoped memory for tpu_custom_call.1']
    #allocation8 [shape = 'u8[196608]{0}', space=vmem, size = 0x30000, scoped, tag = 'input window, operand 3, single buffered']
    #allocation9 [shape = 'u8[65536]{0}', space=vmem, size = 0x10000, scoped, tag = 'input window, operand 5, single buffered']
    #allocation10 [shape = 's32[1]{0}', space=sflag, size = 0x4, scoped, tag = 'scoped memory for tpu_custom_call.1']
    #allocation11 [shape = 'u8[8192]{0}', space=vmem, size = 0x2000, scoped, tag = 'output window, operand 0, single buffered']
    %12 = vsyncpa [#allocation4], 0
    %13 = vsyncpa [#allocation7], 0
    %14 = vsyncpa [#allocation10], 0
    %15 = vsyncpa [#allocation5], 0
    // Predicated region
    $region2: #{tpu_custom_call.1} parent=1 // pred_check
      _
    $region3: #{tpu_custom_call.1} parent=1 // pred_check_branch
      %17 = sbr.rel (0) target = $region5
    $region4: #{tpu_custom_call.1} parent=1 // pred_region
      %s19 = ssub.s32 512, 512
      %20 = vsyncadd [#allocation4], %s19
      %s21 = sshll.u32 [#allocation3], 4
      %s22 = int_to_ptr.vmem [resolvable:$true] %s21
      %27 = dma.hbm_to_vmem [thread:$0]  %s0, 512, %s22, [#allocation4], 128, 128, 8
    $region5: #{tpu_custom_call.1} parent=1 // pred_fallthru
      _
    // Predicated region
    $region6: #{tpu_custom_call.1} parent=1 // pred_check
      _
    $region7: #{tpu_custom_call.1} parent=1 // pred_check_branch
      %29 = sbr.rel (0) target = $region9
    $region8: #{tpu_custom_call.1} parent=1 // pred_region
      %s31 = ssub.s32 6144, 6144
      %32 = vsyncadd [#allocation7], %s31
      %s33 = sshll.u32 [#allocation6], 4
      %s34 = int_to_ptr.vmem [resolvable:$true] %s33
      %39 = dma.hbm_to_vmem [thread:$0]  %s1, 6144, %s34, [#allocation7], 128, 128, 8
    $region9: #{tpu_custom_call.1} parent=1 // pred_fallthru
      _
    // Predicated region
    $region10: #{tpu_custom_call.1} parent=1 // pred_check
      _
    $region11: #{tpu_custom_call.1} parent=1 // pred_check_branch
      %41 = sbr.rel (0) target = $region13
    $region12: #{tpu_custom_call.1} parent=1 // pred_region
      _
    $region13: #{tpu_custom_call.1} parent=1 // pred_fallthru
      _
    // Predicated region
    $region14: #{tpu_custom_call.1} parent=1 // pred_check
      _
    $region15: #{tpu_custom_call.1} parent=1 // pred_check_branch
      %43 = sbr.rel (0) target = $region17
    $region16: #{tpu_custom_call.1} parent=1 // pred_region
      %s45 = ssub.s32 6144, 6144
      %46 = vsyncadd [#allocation7], %s45
      %s47 = sshll.u32 [#allocation8], 4
      %s48 = int_to_ptr.vmem [resolvable:$true] %s47
      %53 = dma.hbm_to_vmem [thread:$0]  %s3, 6144, %s48, [#allocation7], 128, 128, 8
    $region17: #{tpu_custom_call.1} parent=1 // pred_fallthru
      _
    // Predicated region
    $region18: #{tpu_custom_call.1} parent=1 // pred_check
      _
    $region19: #{tpu_custom_call.1} parent=1 // pred_check_branch
      %55 = sbr.rel (0) target = $region21
    $region20: #{tpu_custom_call.1} parent=1 // pred_region
      _
    $region21: #{tpu_custom_call.1} parent=1 // pred_fallthru
      _
    // Predicated region
    $region22: #{tpu_custom_call.1} parent=1 // pred_check
      _
    $region23: #{tpu_custom_call.1} parent=1 // pred_check_branch
      %57 = sbr.rel (0) target = $region25
    $region24: #{tpu_custom_call.1} parent=1 // pred_region
      %s59 = ssub.s32 2048, 2048
      %60 = vsyncadd [#allocation10], %s59
      %s61 = sshll.u32 [#allocation9], 4
      %s62 = int_to_ptr.vmem [resolvable:$true] %s61
      %67 = dma.hbm_to_vmem [thread:$0]  %s5, 2048, %s62, [#allocation10], 128, 128, 8
    $region25: #{tpu_custom_call.1} parent=1 // pred_fallthru
      _
    // Predicated region
    $region26: #{tpu_custom_call.1} parent=1 // pred_check
      _
    $region27: #{tpu_custom_call.1} parent=1 // pred_check_branch
      %69 = sbr.rel (0) target = $region29
    $region28: #{tpu_custom_call.1} parent=1 // pred_region
      _
    $region29: #{tpu_custom_call.1} parent=1 // pred_fallthru
      _
    // Predicated region
    $region30: #{tpu_custom_call.1} parent=1 // pred_check
      _
    $region31: #{tpu_custom_call.1} parent=1 // pred_check_branch
      %71 = sbr.rel (0) target = $region33
    $region32: #{tpu_custom_call.1} parent=1 // pred_region
      %72 = dma.done [#allocation4], 512
    $region33: #{tpu_custom_call.1} parent=1 // pred_fallthru
      _
    // Predicated region
    $region34: #{tpu_custom_call.1} parent=1 // pred_check
      _
    $region35: #{tpu_custom_call.1} parent=1 // pred_check_branch
      %74 = sbr.rel (0) target = $region37
    $region36: #{tpu_custom_call.1} parent=1 // pred_region
      %75 = dma.done [#allocation7], 6144
    $region37: #{tpu_custom_call.1} parent=1 // pred_fallthru
      _
    // Predicated region
    $region38: #{tpu_custom_call.1} parent=1 // pred_check
      _
    $region39: #{tpu_custom_call.1} parent=1 // pred_check_branch
      %77 = sbr.rel (0) target = $region41
    $region40: #{tpu_custom_call.1} parent=1 // pred_region
      %78 = dma.done [#allocation7], 6144
    $region41: #{tpu_custom_call.1} parent=1 // pred_fallthru
      _
    // Predicated region
    $region42: #{tpu_custom_call.1} parent=1 // pred_check
      _
    $region43: #{tpu_custom_call.1} parent=1 // pred_check_branch
      %80 = sbr.rel (0) target = $region45
    $region44: #{tpu_custom_call.1} parent=1 // pred_region
      %81 = dma.done [#allocation10], 2048
    $region45: #{tpu_custom_call.1} parent=1 // pred_fallthru
      _
    %v82 = vld [vmem:[#allocation3] sm:$0xff]
    %v83 = vld [vmem:[#allocation3 + $0x8] sm:$0xff]
    %v84 = vld [vmem:[#allocation3 + $0x10] sm:$0xff]
    %v85 = vld [vmem:[#allocation3 + $0x18] sm:$0xff]
    %v86 = vld [vmem:[#allocation9] sm:$0xff]
    %v87 = vld [vmem:[#allocation9 + $0x8] sm:$0xff]
    %v88 = vld [vmem:[#allocation9 + $0x10] sm:$0xff]
    %v89 = vld [vmem:[#allocation9 + $0x18] sm:$0xff]
    %v90 = vld [vmem:[#allocation9 + $0x20] sm:$0xff]
    %v91 = vld [vmem:[#allocation9 + $0x28] sm:$0xff]
    %v92 = vld [vmem:[#allocation9 + $0x30] sm:$0xff]
    %v93 = vld [vmem:[#allocation9 + $0x38] sm:$0xff]
    %v94 = vld [vmem:[#allocation9 + $0x40] sm:$0xff]
    %v95 = vld [vmem:[#allocation9 + $0x48] sm:$0xff]
    %v96 = vld [vmem:[#allocation9 + $0x50] sm:$0xff]
    %v97 = vld [vmem:[#allocation9 + $0x58] sm:$0xff]
    %v98 = vld [vmem:[#allocation9 + $0x60] sm:$0xff]
    %v99 = vld [vmem:[#allocation9 + $0x68] sm:$0xff]
    %v100 = vld [vmem:[#allocation9 + $0x70] sm:$0xff]
    %v101 = vld [vmem:[#allocation9 + $0x78] sm:$0xff]
    %v102 = vld [vmem:[%s6] sm:$0x1]
    %v104 = vlaneseq
    %v105 = vshrl.u32 %v104, 7
    %v106 = vsub.s32 0, %v105
    %v107 = vrot.slane %v102, %v106
    %109 = vmatprep.subr.mxu0 0.0
    %110 = vmatpush1.msra.mxu0 %v86
    %111 = vmatprep.subr.mxu0 0.0
    %112 = vmatpush1.msra.mxu0 %v87
    %113 = vmatprep.subr.mxu0 0.0
    %114 = vmatpush1.msra.mxu0 %v88
    %115 = vmatprep.subr.mxu0 0.0
    %116 = vmatpush1.msra.mxu0 %v89
    %117 = vmatprep.subr.mxu0 0.0
    %118 = vmatpush1.msra.mxu0 %v90
    %119 = vmatprep.subr.mxu0 0.0
    %120 = vmatpush1.msra.mxu0 %v91
    %121 = vmatprep.subr.mxu0 0.0
    %122 = vmatpush1.msra.mxu0 %v92
    %123 = vmatprep.subr.mxu0 0.0
    %124 = vmatpush1.msra.mxu0 %v93
    %125 = vmatprep.subr.mxu0 0.0
    %126 = vmatpush1.msra.mxu0 %v94
    %127 = vmatprep.subr.mxu0 0.0
    %128 = vmatpush1.msra.mxu0 %v95
    %129 = vmatprep.subr.mxu0 0.0
    %130 = vmatpush1.msra.mxu0 %v96
    %131 = vmatprep.subr.mxu0 0.0
    %132 = vmatpush1.msra.mxu0 %v97
    %133 = vmatprep.subr.mxu0 0.0
    %134 = vmatpush1.msra.mxu0 %v98
    %135 = vmatprep.subr.mxu0 0.0
    %136 = vmatpush1.msra.mxu0 %v99
    %137 = vmatprep.subr.mxu0 0.0
    %138 = vmatpush1.msra.mxu0 %v100
    %139 = vmatprep.subr.mxu0 0.0
    %140 = vmatpush1.msra.mxu0 %v101
    %141 = vmatprep.subr.mxu0 0.0
    %142 = vmatpush1.msra.mxu0 0.0
    %143 = vmatprep.subr.mxu0 0.0
    %144 = vmatpush1.msra.mxu0 0.0
    %145 = vmatprep.subr.mxu0 0.0
    %146 = vmatpush1.msra.mxu0 0.0
    %147 = vmatprep.subr.mxu0 0.0
    %148 = vmatpush1.msra.mxu0 0.0
    %149 = vmatprep.subr.mxu0 0.0
    %150 = vmatpush1.msra.mxu0 0.0
    %151 = vmatprep.subr.mxu0 0.0
    %152 = vmatpush1.msra.mxu0 0.0
    %153 = vmatprep.subr.mxu0 0.0
    %154 = vmatpush1.msra.mxu0 0.0
    %155 = vmatprep.subr.mxu0 0.0
    %156 = vmatpush1.msra.mxu0 0.0
    %157 = vmatprep.subr.mxu0 0.0
    %158 = vmatpush1.msra.mxu0 0.0
    %159 = vmatprep.subr.mxu0 0.0
    %160 = vmatpush1.msra.mxu0 0.0
    %161 = vmatprep.subr.mxu0 0.0
    %162 = vmatpush1.msra.mxu0 0.0
    %163 = vmatprep.subr.mxu0 0.0
    %164 = vmatpush1.msra.mxu0 0.0
    %165 = vmatprep.subr.mxu0 0.0
    %166 = vmatpush1.msra.mxu0 0.0
    %167 = vmatprep.subr.mxu0 0.0
    %168 = vmatpush1.msra.mxu0 0.0
    %169 = vmatprep.subr.mxu0 0.0
    %170 = vmatpush1.msra.mxu0 0.0
    %171 = vmatprep.subr.mxu0 0.0
    %172 = vmatpush1.msra.mxu0 0.0
    %173 = vmatprep.mubr.f32.mxu0 0.0
    %174 = vmatmul.mubr.f32.gmra.mrb[0].mxu0 %v82
    %v175 = vpop.f32.mrb[0].mxu0
    %v176 = vadd.f32 %v107, %v175
    %v177 = vpop.f32.mrb[0].mxu0
    %178 = vmatprep.mubr.f32.mxu0 0.0
    %179 = vmatmul.mubr.f32.gmra.mrb[0].mxu0 %v83
    %v180 = vpop.f32.mrb[0].mxu0
    %v181 = vadd.f32 %v107, %v180
    %v182 = vpop.f32.mrb[0].mxu0
    %183 = vmatprep.mubr.f32.mxu0 0.0
    %184 = vmatmul.mubr.f32.gmra.mrb[0].mxu0 %v84
    %v185 = vpop.f32.mrb[0].mxu0
    %v186 = vadd.f32 %v107, %v185
    %v187 = vpop.f32.mrb[0].mxu0
    %188 = vmatprep.mubr.f32.mxu0 0.0
    %189 = vmatmul.mubr.f32.gmra.mrb[0].mxu0 %v85
    %v190 = vpop.f32.mrb[0].mxu0
    %v191 = vadd.f32 %v107, %v190
    %v192 = vpop.f32.mrb[0].mxu0
    %193 = vdwg.mxu0
    %vm194 = vcmp.gt.f32.partialorder %v82, 0.0
    %vm195 = vcmp.gt.f32.partialorder %v83, 0.0
    %vm196 = vcmp.gt.f32.partialorder %v84, 0.0
    %vm197 = vcmp.gt.f32.partialorder %v85, 0.0
    %v198 = vmul.f32 %v82, 0.15
    %v199 = vmul.f32 %v83, 0.15
    %v200 = vmul.f32 %v84, 0.15
    %v201 = vmul.f32 %v85, 0.15
    %v202 = vsel %vm194, %v82, %v198
    %v203 = vsel %vm195, %v83, %v199
    %v204 = vsel %vm196, %v84, %v200
    %v205 = vsel %vm197, %v85, %v201
    %v206 = vlaneseq
    %v207 = vshrl.u32 %v206, 7
    %v208 = vadd.s32 %v207, 8
    %v209 = vadd.s32 %v207, 16
    %v210 = vadd.s32 %v207, 24
    %vm211 = vcmp.lt.s32.totalorder %v207, 0
    %v212 = vsub.s32 0, %v207
    %v213 = vsel %vm211, %v212, %v207
    %v214 = vshrl.u32 %v213, 4
    %v215 = vand.u32 %v213, 15
    %v216 = vsub.s32 0, %v215
    %v217 = vsel %vm211, %v216, %v215
    %vm218 = vcmp.lt.s32.totalorder %v208, 0
    %v219 = vsub.s32 0, %v208
    %v220 = vsel %vm218, %v219, %v208
    %v221 = vshrl.u32 %v220, 4
    %v222 = vand.u32 %v220, 15
    %v223 = vsub.s32 0, %v222
    %v224 = vsel %vm218, %v223, %v222
    %vm225 = vcmp.lt.s32.totalorder %v209, 0
    %v226 = vsub.s32 0, %v209
    %v227 = vsel %vm225, %v226, %v209
    %v228 = vshrl.u32 %v227, 4
    %v229 = vand.u32 %v227, 15
    %v230 = vsub.s32 0, %v229
    %v231 = vsel %vm225, %v230, %v229
    %vm232 = vcmp.lt.s32.totalorder %v210, 0
    %v233 = vsub.s32 0, %v210
    %v234 = vsel %vm232, %v233, %v210
    %v235 = vshrl.u32 %v234, 4
    %v236 = vand.u32 %v234, 15
    %v237 = vsub.s32 0, %v236
    %v238 = vsel %vm232, %v237, %v236
    %vm239 = vcmp.ne.s32.totalorder %v217, 0
    %vm240 = vcmp.ne.s32.totalorder %v224, 0
    %vm241 = vcmp.ne.s32.totalorder %v231, 0
    %vm242 = vcmp.ne.s32.totalorder %v238, 0
    %vm243 = vcmp.lt.s32.totalorder %v217, 0
    %vm244 = vcmp.lt.s32.totalorder %v224, 0
    %vm245 = vcmp.lt.s32.totalorder %v231, 0
    %vm246 = vcmp.lt.s32.totalorder %v238, 0
    %vm247 = vmand %vm243, %vm239
    %vm248 = vmand %vm244, %vm240
    %vm249 = vmand %vm245, %vm241
    %vm250 = vmand %vm246, %vm242
    %v251 = vadd.s32 %v217, 16
    %v252 = vadd.s32 %v224, 16
    %v253 = vadd.s32 %v231, 16
    %v254 = vadd.s32 %v238, 16
    %v255 = vsel %vm247, %v251, %v217
    %v256 = vsel %vm248, %v252, %v224
    %v257 = vsel %vm249, %v253, %v231
    %v258 = vsel %vm250, %v254, %v238
    %vm259 = vcmp.eq.s32.totalorder %v255, 0
    %vm260 = vcmp.eq.s32.totalorder %v256, 0
    %vm261 = vcmp.eq.s32.totalorder %v257, 0
    %vm262 = vcmp.eq.s32.totalorder %v258, 0
    %v263 = vrot.slane %v202, 7
    %v264 = vrot.slane %v203, 7
    %v265 = vrot.slane %v204, 7
    %v266 = vrot.slane %v205, 7
    %vm267 = vcmp.lt.s32.totalorder %v207, 1
    %v268 = vsel %vm267, %v265, %v266
    %v269 = vsel %vm267, %v264, %v265
    %v270 = vsel %vm267, %v263, %v264
    %v271 = vsel %vm267, %v266, %v263
    %v272 = vsel %vm259, 0.0, %v271
    %v273 = vsel %vm260, 0.0, %v270
    %v274 = vsel %vm261, 0.0, %v269
    %v275 = vsel %vm262, 0.0, %v268
    %vm276 = vcmp.eq.s32.totalorder %v255, 15
    %vm277 = vcmp.eq.s32.totalorder %v256, 15
    %vm278 = vcmp.eq.s32.totalorder %v257, 15
    %vm279 = vcmp.eq.s32.totalorder %v258, 15
    %v280 = vrot.slane %v202, 1
    %v281 = vrot.slane %v203, 1
    %v282 = vrot.slane %v204, 1
    %v283 = vrot.slane %v205, 1
    %vm284 = vcmp.lt.s32.totalorder %v207, 7
    %v285 = vsel %vm284, %v282, %v283
    %v286 = vsel %vm284, %v281, %v282
    %v287 = vsel %vm284, %v280, %v281
    %v288 = vsel %vm284, %v283, %v280
    %v289 = vsel %vm276, 0.0, %v287
    %v290 = vsel %vm277, 0.0, %v286
    %v291 = vsel %vm278, 0.0, %v285
    %v292 = vsel %vm279, 0.0, %v288
    %v293 = vld [vmem:[#allocation6] sm:$0xff]
    %v294 = vld [vmem:[#allocation6 + $0x8] sm:$0xff]
    %v295 = vld [vmem:[#allocation6 + $0x10] sm:$0xff]
    %v296 = vld [vmem:[#allocation6 + $0x18] sm:$0xff]
    %v297 = vld [vmem:[#allocation6 + $0x20] sm:$0xff]
    %v298 = vld [vmem:[#allocation6 + $0x28] sm:$0xff]
    %v299 = vld [vmem:[#allocation6 + $0x30] sm:$0xff]
    %v300 = vld [vmem:[#allocation6 + $0x38] sm:$0xff]
    %v301 = vld [vmem:[#allocation6 + $0x40] sm:$0xff]
    %v302 = vld [vmem:[#allocation6 + $0x48] sm:$0xff]
    %v303 = vld [vmem:[#allocation6 + $0x50] sm:$0xff]
    %v304 = vld [vmem:[#allocation6 + $0x58] sm:$0xff]
    %v305 = vld [vmem:[#allocation6 + $0x60] sm:$0xff]
    %v306 = vld [vmem:[#allocation6 + $0x68] sm:$0xff]
    %v307 = vld [vmem:[#allocation6 + $0x70] sm:$0xff]
    %v308 = vld [vmem:[#allocation6 + $0x78] sm:$0xff]
    %s309 = scalar_lea.vmem [#allocation6], 128
    %v310 = vld [vmem:[%s309] sm:$0xff]
    %v311 = vld [vmem:[%s309 + $0x8] sm:$0xff]
    %v312 = vld [vmem:[%s309 + $0x10] sm:$0xff]
    %v313 = vld [vmem:[%s309 + $0x18] sm:$0xff]
    %v314 = vld [vmem:[%s309 + $0x20] sm:$0xff]
    %v315 = vld [vmem:[%s309 + $0x28] sm:$0xff]
    %v316 = vld [vmem:[%s309 + $0x30] sm:$0xff]
    %v317 = vld [vmem:[%s309 + $0x38] sm:$0xff]
    %v318 = vld [vmem:[%s309 + $0x40] sm:$0xff]
    %v319 = vld [vmem:[%s309 + $0x48] sm:$0xff]
    %v320 = vld [vmem:[%s309 + $0x50] sm:$0xff]
    %v321 = vld [vmem:[%s309 + $0x58] sm:$0xff]
    %v322 = vld [vmem:[%s309 + $0x60] sm:$0xff]
    %v323 = vld [vmem:[%s309 + $0x68] sm:$0xff]
    %v324 = vld [vmem:[%s309 + $0x70] sm:$0xff]
    %v325 = vld [vmem:[%s309 + $0x78] sm:$0xff]
    %326 = vmatprep.subr.mxu0 0.0
    %327 = vmatpush1.msra.mxu0 %v310
    %328 = vmatprep.subr.mxu0 0.0
    %329 = vmatpush1.msra.mxu0 %v311
    %330 = vmatprep.subr.mxu0 0.0
    %331 = vmatpush1.msra.mxu0 %v312
    %332 = vmatprep.subr.mxu0 0.0
    %333 = vmatpush1.msra.mxu0 %v313
    %334 = vmatprep.subr.mxu0 0.0
    %335 = vmatpush1.msra.mxu0 %v314
    %336 = vmatprep.subr.mxu0 0.0
    %337 = vmatpush1.msra.mxu0 %v315
    %338 = vmatprep.subr.mxu0 0.0
    %339 = vmatpush1.msra.mxu0 %v316
    %340 = vmatprep.subr.mxu0 0.0
    %341 = vmatpush1.msra.mxu0 %v317
    %342 = vmatprep.subr.mxu0 0.0
    %343 = vmatpush1.msra.mxu0 %v318
    %344 = vmatprep.subr.mxu0 0.0
    %345 = vmatpush1.msra.mxu0 %v319
    %346 = vmatprep.subr.mxu0 0.0
    %347 = vmatpush1.msra.mxu0 %v320
    %348 = vmatprep.subr.mxu0 0.0
    %349 = vmatpush1.msra.mxu0 %v321
    %350 = vmatprep.subr.mxu0 0.0
    %351 = vmatpush1.msra.mxu0 %v322
    %352 = vmatprep.subr.mxu0 0.0
    %353 = vmatpush1.msra.mxu0 %v323
    %354 = vmatprep.subr.mxu0 0.0
    %355 = vmatpush1.msra.mxu0 %v324
    %356 = vmatprep.subr.mxu0 0.0
    %357 = vmatpush1.msra.mxu0 %v325
    %358 = vmatprep.subr.mxu0 0.0
    %359 = vmatpush1.msra.mxu0 0.0
    %360 = vmatprep.subr.mxu0 0.0
    %361 = vmatpush1.msra.mxu0 0.0
    %362 = vmatprep.subr.mxu0 0.0
    %363 = vmatpush1.msra.mxu0 0.0
    %364 = vmatprep.subr.mxu0 0.0
    %365 = vmatpush1.msra.mxu0 0.0
    %366 = vmatprep.subr.mxu0 0.0
    %367 = vmatpush1.msra.mxu0 0.0
    %368 = vmatprep.subr.mxu0 0.0
    %369 = vmatpush1.msra.mxu0 0.0
    %370 = vmatprep.subr.mxu0 0.0
    %371 = vmatpush1.msra.mxu0 0.0
    %372 = vmatprep.subr.mxu0 0.0
    %373 = vmatpush1.msra.mxu0 0.0
    %374 = vmatprep.subr.mxu0 0.0
    %375 = vmatpush1.msra.mxu0 0.0
    %376 = vmatprep.subr.mxu0 0.0
    %377 = vmatpush1.msra.mxu0 0.0
    %378 = vmatprep.subr.mxu0 0.0
    %379 = vmatpush1.msra.mxu0 0.0
    %380 = vmatprep.subr.mxu0 0.0
    %381 = vmatpush1.msra.mxu0 0.0
    %382 = vmatprep.subr.mxu0 0.0
    %383 = vmatpush1.msra.mxu0 0.0
    %384 = vmatprep.subr.mxu0 0.0
    %385 = vmatpush1.msra.mxu0 0.0
    %386 = vmatprep.subr.mxu0 0.0
    %387 = vmatpush1.msra.mxu0 0.0
    %388 = vmatprep.subr.mxu0 0.0
    %389 = vmatpush1.msra.mxu0 0.0
    %390 = vmatprep.mubr.f32.mxu0 0.0
    %391 = vmatmul.mubr.f32.gmra.mrb[0].mxu0 %v202
    %v392 = vpop.f32.mrb[0].mxu0
    %v393 = vadd.f32 0.0, %v392
    %v394 = vpop.f32.mrb[0].mxu0
    %395 = vmatprep.mubr.f32.mxu0 0.0
    %396 = vmatmul.mubr.f32.gmra.mrb[0].mxu0 %v203
    %v397 = vpop.f32.mrb[0].mxu0
    %v398 = vadd.f32 0.0, %v397
    %v399 = vpop.f32.mrb[0].mxu0
    %400 = vmatprep.mubr.f32.mxu0 0.0
    %401 = vmatmul.mubr.f32.gmra.mrb[0].mxu0 %v204
    %v402 = vpop.f32.mrb[0].mxu0
    %v403 = vadd.f32 0.0, %v402
    %v404 = vpop.f32.mrb[0].mxu0
    %405 = vmatprep.mubr.f32.mxu0 0.0
    %406 = vmatmul.mubr.f32.gmra.mrb[0].mxu0 %v205
    %v407 = vpop.f32.mrb[0].mxu0
    %v408 = vadd.f32 0.0, %v407
    %v409 = vpop.f32.mrb[0].mxu0
    %410 = vdwg.mxu0
    %411 = vmatprep.subr.mxu0 0.0
    %412 = vmatpush1.msra.mxu0 %v293
    %413 = vmatprep.subr.mxu0 0.0
    %414 = vmatpush1.msra.mxu0 %v294
    %415 = vmatprep.subr.mxu0 0.0
    %416 = vmatpush1.msra.mxu0 %v295
    %417 = vmatprep.subr.mxu0 0.0
    %418 = vmatpush1.msra.mxu0 %v296
    %419 = vmatprep.subr.mxu0 0.0
    %420 = vmatpush1.msra.mxu0 %v297
    %421 = vmatprep.subr.mxu0 0.0
    %422 = vmatpush1.msra.mxu0 %v298
    %423 = vmatprep.subr.mxu0 0.0
    %424 = vmatpush1.msra.mxu0 %v299
    %425 = vmatprep.subr.mxu0 0.0
    %426 = vmatpush1.msra.mxu0 %v300
    %427 = vmatprep.subr.mxu0 0.0
    %428 = vmatpush1.msra.mxu0 %v301
    %429 = vmatprep.subr.mxu0 0.0
    %430 = vmatpush1.msra.mxu0 %v302
    %431 = vmatprep.subr.mxu0 0.0
    %432 = vmatpush1.msra.mxu0 %v303
    %433 = vmatprep.subr.mxu0 0.0
    %434 = vmatpush1.msra.mxu0 %v304
    %435 = vmatprep.subr.mxu0 0.0
    %436 = vmatpush1.msra.mxu0 %v305
    %437 = vmatprep.subr.mxu0 0.0
    %438 = vmatpush1.msra.mxu0 %v306
    %439 = vmatprep.subr.mxu0 0.0
    %440 = vmatpush1.msra.mxu0 %v307
    %441 = vmatprep.subr.mxu0 0.0
    %442 = vmatpush1.msra.mxu0 %v308
    %443 = vmatprep.subr.mxu0 0.0
    %444 = vmatpush1.msra.mxu0 0.0
    %445 = vmatprep.subr.mxu0 0.0
    %446 = vmatpush1.msra.mxu0 0.0
    %447 = vmatprep.subr.mxu0 0.0
    %448 = vmatpush1.msra.mxu0 0.0
    %449 = vmatprep.subr.mxu0 0.0
    %450 = vmatpush1.msra.mxu0 0.0
    %451 = vmatprep.subr.mxu0 0.0
    %452 = vmatpush1.msra.mxu0 0.0
    %453 = vmatprep.subr.mxu0 0.0
    %454 = vmatpush1.msra.mxu0 0.0
    %455 = vmatprep.subr.mxu0 0.0
    %456 = vmatpush1.msra.mxu0 0.0
    %457 = vmatprep.subr.mxu0 0.0
    %458 = vmatpush1.msra.mxu0 0.0
    %459 = vmatprep.subr.mxu0 0.0
    %460 = vmatpush1.msra.mxu0 0.0
    %461 = vmatprep.subr.mxu0 0.0
    %462 = vmatpush1.msra.mxu0 0.0
    %463 = vmatprep.subr.mxu0 0.0
    %464 = vmatpush1.msra.mxu0 0.0
    %465 = vmatprep.subr.mxu0 0.0
    %466 = vmatpush1.msra.mxu0 0.0
    %467 = vmatprep.subr.mxu0 0.0
    %468 = vmatpush1.msra.mxu0 0.0
    %469 = vmatprep.subr.mxu0 0.0
    %470 = vmatpush1.msra.mxu0 0.0
    %471 = vmatprep.subr.mxu0 0.0
    %472 = vmatpush1.msra.mxu0 0.0
    %473 = vmatprep.subr.mxu0 0.0
    %474 = vmatpush1.msra.mxu0 0.0
    %475 = vmatprep.mubr.f32.mxu0 0.0
    %476 = vmatmul.mubr.f32.gmra.mrb[0].mxu0 %v272
    %v477 = vpop.f32.mrb[0].mxu0
    %v478 = vadd.f32 %v393, %v477
    %v479 = vpop.f32.mrb[0].mxu0
    %480 = vmatprep.mubr.f32.mxu0 0.0
    %481 = vmatmul.mubr.f32.gmra.mrb[0].mxu0 %v273
    %v482 = vpop.f32.mrb[0].mxu0
    %v483 = vadd.f32 %v398, %v482
    %v484 = vpop.f32.mrb[0].mxu0
    %485 = vmatprep.mubr.f32.mxu0 0.0
    %486 = vmatmul.mubr.f32.gmra.mrb[0].mxu0 %v274
    %v487 = vpop.f32.mrb[0].mxu0
    %v488 = vadd.f32 %v403, %v487
    %v489 = vpop.f32.mrb[0].mxu0
    %490 = vmatprep.mubr.f32.mxu0 0.0
    %491 = vmatmul.mubr.f32.gmra.mrb[0].mxu0 %v275
    %v492 = vpop.f32.mrb[0].mxu0
    %v493 = vadd.f32 %v408, %v492
    %v494 = vpop.f32.mrb[0].mxu0
    %495 = vdwg.mxu0
    %s496 = scalar_lea.vmem [#allocation6], 256
    %v497 = vld [vmem:[%s496] sm:$0xff]
    %v498 = vld [vmem:[%s496 + $0x8] sm:$0xff]
    %v499 = vld [vmem:[%s496 + $0x10] sm:$0xff]
    %v500 = vld [vmem:[%s496 + $0x18] sm:$0xff]
    %v501 = vld [vmem:[%s496 + $0x20] sm:$0xff]
    %v502 = vld [vmem:[%s496 + $0x28] sm:$0xff]
    %v503 = vld [vmem:[%s496 + $0x30] sm:$0xff]
    %v504 = vld [vmem:[%s496 + $0x38] sm:$0xff]
    %v505 = vld [vmem:[%s496 + $0x40] sm:$0xff]
    %v506 = vld [vmem:[%s496 + $0x48] sm:$0xff]
    %v507 = vld [vmem:[%s496 + $0x50] sm:$0xff]
    %v508 = vld [vmem:[%s496 + $0x58] sm:$0xff]
    %v509 = vld [vmem:[%s496 + $0x60] sm:$0xff]
    %v510 = vld [vmem:[%s496 + $0x68] sm:$0xff]
    %v511 = vld [vmem:[%s496 + $0x70] sm:$0xff]
    %v512 = vld [vmem:[%s496 + $0x78] sm:$0xff]
    %513 = vmatprep.subr.mxu0 0.0
    %514 = vmatpush1.msra.mxu0 %v497
    %515 = vmatprep.subr.mxu0 0.0
    %516 = vmatpush1.msra.mxu0 %v498
    %517 = vmatprep.subr.mxu0 0.0
    %518 = vmatpush1.msra.mxu0 %v499
    %519 = vmatprep.subr.mxu0 0.0
    %520 = vmatpush1.msra.mxu0 %v500
    %521 = vmatprep.subr.mxu0 0.0
    %522 = vmatpush1.msra.mxu0 %v501
    %523 = vmatprep.subr.mxu0 0.0
    %524 = vmatpush1.msra.mxu0 %v502
    %525 = vmatprep.subr.mxu0 0.0
    %526 = vmatpush1.msra.mxu0 %v503
    %527 = vmatprep.subr.mxu0 0.0
    %528 = vmatpush1.msra.mxu0 %v504
    %529 = vmatprep.subr.mxu0 0.0
    %530 = vmatpush1.msra.mxu0 %v505
    %531 = vmatprep.subr.mxu0 0.0
    %532 = vmatpush1.msra.mxu0 %v506
    %533 = vmatprep.subr.mxu0 0.0
    %534 = vmatpush1.msra.mxu0 %v507
    %535 = vmatprep.subr.mxu0 0.0
    %536 = vmatpush1.msra.mxu0 %v508
    %537 = vmatprep.subr.mxu0 0.0
    %538 = vmatpush1.msra.mxu0 %v509
    %539 = vmatprep.subr.mxu0 0.0
    %540 = vmatpush1.msra.mxu0 %v510
    %541 = vmatprep.subr.mxu0 0.0
    %542 = vmatpush1.msra.mxu0 %v511
    %543 = vmatprep.subr.mxu0 0.0
    %544 = vmatpush1.msra.mxu0 %v512
    %545 = vmatprep.subr.mxu0 0.0
    %546 = vmatpush1.msra.mxu0 0.0
    %547 = vmatprep.subr.mxu0 0.0
    %548 = vmatpush1.msra.mxu0 0.0
    %549 = vmatprep.subr.mxu0 0.0
    %550 = vmatpush1.msra.mxu0 0.0
    %551 = vmatprep.subr.mxu0 0.0
    %552 = vmatpush1.msra.mxu0 0.0
    %553 = vmatprep.subr.mxu0 0.0
    %554 = vmatpush1.msra.mxu0 0.0
    %555 = vmatprep.subr.mxu0 0.0
    %556 = vmatpush1.msra.mxu0 0.0
    %557 = vmatprep.subr.mxu0 0.0
    %558 = vmatpush1.msra.mxu0 0.0
    %559 = vmatprep.subr.mxu0 0.0
    %560 = vmatpush1.msra.mxu0 0.0
    %561 = vmatprep.subr.mxu0 0.0
    %562 = vmatpush1.msra.mxu0 0.0
    %563 = vmatprep.subr.mxu0 0.0
    %564 = vmatpush1.msra.mxu0 0.0
    %565 = vmatprep.subr.mxu0 0.0
    %566 = vmatpush1.msra.mxu0 0.0
    %567 = vmatprep.subr.mxu0 0.0
    %568 = vmatpush1.msra.mxu0 0.0
    %569 = vmatprep.subr.mxu0 0.0
    %570 = vmatpush1.msra.mxu0 0.0
    %571 = vmatprep.subr.mxu0 0.0
    %572 = vmatpush1.msra.mxu0 0.0
    %573 = vmatprep.subr.mxu0 0.0
    %574 = vmatpush1.msra.mxu0 0.0
    %575 = vmatprep.subr.mxu0 0.0
    %576 = vmatpush1.msra.mxu0 0.0
    %577 = vmatprep.mubr.f32.mxu0 0.0
    %578 = vmatmul.mubr.f32.gmra.mrb[0].mxu0 %v289
    %v579 = vpop.f32.mrb[0].mxu0
    %v580 = vadd.f32 0.0, %v579
    %v581 = vpop.f32.mrb[0].mxu0
    %582 = vmatprep.mubr.f32.mxu0 0.0
    %583 = vmatmul.mubr.f32.gmra.mrb[0].mxu0 %v290
    %v584 = vpop.f32.mrb[0].mxu0
    %v585 = vadd.f32 0.0, %v584
    %v586 = vpop.f32.mrb[0].mxu0
    %587 = vmatprep.mubr.f32.mxu0 0.0
    %588 = vmatmul.mubr.f32.gmra.mrb[0].mxu0 %v291
    %v589 = vpop.f32.mrb[0].mxu0
    %v590 = vadd.f32 0.0, %v589
    %v591 = vpop.f32.mrb[0].mxu0
    %592 = vmatprep.mubr.f32.mxu0 0.0
    %593 = vmatmul.mubr.f32.gmra.mrb[0].mxu0 %v292
    %v594 = vpop.f32.mrb[0].mxu0
    %v595 = vadd.f32 0.0, %v594
    %v596 = vpop.f32.mrb[0].mxu0
    %597 = vdwg.mxu0
    %v598 = vadd.f32 %v478, %v580
    %v599 = vadd.f32 %v483, %v585
    %v600 = vadd.f32 %v488, %v590
    %v601 = vadd.f32 %v493, %v595
    %v602 = vld [vmem:[%s2] sm:$0x1]
    %v604 = vlaneseq
    %v605 = vshrl.u32 %v604, 7
    %v606 = vsub.s32 0, %v605
    %v607 = vrot.slane %v602, %v606
    %v609 = vadd.f32 %v598, %v607
    %v610 = vadd.f32 %v599, %v607
    %v611 = vadd.f32 %v600, %v607
    %v612 = vadd.f32 %v601, %v607
    %vm613 = vcmp.gt.f32.partialorder %v609, 0.0
    %vm614 = vcmp.gt.f32.partialorder %v610, 0.0
    %vm615 = vcmp.gt.f32.partialorder %v611, 0.0
    %vm616 = vcmp.gt.f32.partialorder %v612, 0.0
    %v617 = vmul.f32 %v609, 0.15
    %v618 = vmul.f32 %v610, 0.15
    %v619 = vmul.f32 %v611, 0.15
    %v620 = vmul.f32 %v612, 0.15
    %v621 = vsel %vm613, %v609, %v617
    %v622 = vsel %vm614, %v610, %v618
    %v623 = vsel %vm615, %v611, %v619
    %v624 = vsel %vm616, %v612, %v620
    %v625 = vrot.slane %v621, 7
    %v626 = vrot.slane %v622, 7
    %v627 = vrot.slane %v623, 7
    %v628 = vrot.slane %v624, 7
    %v629 = vsel %vm267, %v627, %v628
    %v630 = vsel %vm267, %v626, %v627
    %v631 = vsel %vm267, %v625, %v626
    %v632 = vsel %vm267, %v628, %v625
    %v633 = vsel %vm259, 0.0, %v632
    %v634 = vsel %vm260, 0.0, %v631
    %v635 = vsel %vm261, 0.0, %v630
    %v636 = vsel %vm262, 0.0, %v629
    %v637 = vrot.slane %v621, 1
    %v638 = vrot.slane %v622, 1
    %v639 = vrot.slane %v623, 1
    %v640 = vrot.slane %v624, 1
    %v641 = vsel %vm284, %v639, %v640
    %v642 = vsel %vm284, %v638, %v639
    %v643 = vsel %vm284, %v637, %v638
    %v644 = vsel %vm284, %v640, %v637
    %v645 = vsel %vm276, 0.0, %v643
    %v646 = vsel %vm277, 0.0, %v642
    %v647 = vsel %vm278, 0.0, %v641
    %v648 = vsel %vm279, 0.0, %v644
    %v649 = vld [vmem:[#allocation8] sm:$0xff]
    %v650 = vld [vmem:[#allocation8 + $0x8] sm:$0xff]
    %v651 = vld [vmem:[#allocation8 + $0x10] sm:$0xff]
    %v652 = vld [vmem:[#allocation8 + $0x18] sm:$0xff]
    %v653 = vld [vmem:[#allocation8 + $0x20] sm:$0xff]
    %v654 = vld [vmem:[#allocation8 + $0x28] sm:$0xff]
    %v655 = vld [vmem:[#allocation8 + $0x30] sm:$0xff]
    %v656 = vld [vmem:[#allocation8 + $0x38] sm:$0xff]
    %v657 = vld [vmem:[#allocation8 + $0x40] sm:$0xff]
    %v658 = vld [vmem:[#allocation8 + $0x48] sm:$0xff]
    %v659 = vld [vmem:[#allocation8 + $0x50] sm:$0xff]
    %v660 = vld [vmem:[#allocation8 + $0x58] sm:$0xff]
    %v661 = vld [vmem:[#allocation8 + $0x60] sm:$0xff]
    %v662 = vld [vmem:[#allocation8 + $0x68] sm:$0xff]
    %v663 = vld [vmem:[#allocation8 + $0x70] sm:$0xff]
    %v664 = vld [vmem:[#allocation8 + $0x78] sm:$0xff]
    %s665 = scalar_lea.vmem [#allocation8], 128
    %v666 = vld [vmem:[%s665] sm:$0xff]
    %v667 = vld [vmem:[%s665 + $0x8] sm:$0xff]
    %v668 = vld [vmem:[%s665 + $0x10] sm:$0xff]
    %v669 = vld [vmem:[%s665 + $0x18] sm:$0xff]
    %v670 = vld [vmem:[%s665 + $0x20] sm:$0xff]
    %v671 = vld [vmem:[%s665 + $0x28] sm:$0xff]
    %v672 = vld [vmem:[%s665 + $0x30] sm:$0xff]
    %v673 = vld [vmem:[%s665 + $0x38] sm:$0xff]
    %v674 = vld [vmem:[%s665 + $0x40] sm:$0xff]
    %v675 = vld [vmem:[%s665 + $0x48] sm:$0xff]
    %v676 = vld [vmem:[%s665 + $0x50] sm:$0xff]
    %v677 = vld [vmem:[%s665 + $0x58] sm:$0xff]
    %v678 = vld [vmem:[%s665 + $0x60] sm:$0xff]
    %v679 = vld [vmem:[%s665 + $0x68] sm:$0xff]
    %v680 = vld [vmem:[%s665 + $0x70] sm:$0xff]
    %v681 = vld [vmem:[%s665 + $0x78] sm:$0xff]
    %682 = vmatprep.subr.mxu0 0.0
    %683 = vmatpush1.msra.mxu0 %v666
    %684 = vmatprep.subr.mxu0 0.0
    %685 = vmatpush1.msra.mxu0 %v667
    %686 = vmatprep.subr.mxu0 0.0
    %687 = vmatpush1.msra.mxu0 %v668
    %688 = vmatprep.subr.mxu0 0.0
    %689 = vmatpush1.msra.mxu0 %v669
    %690 = vmatprep.subr.mxu0 0.0
    %691 = vmatpush1.msra.mxu0 %v670
    %692 = vmatprep.subr.mxu0 0.0
    %693 = vmatpush1.msra.mxu0 %v671
    %694 = vmatprep.subr.mxu0 0.0
    %695 = vmatpush1.msra.mxu0 %v672
    %696 = vmatprep.subr.mxu0 0.0
    %697 = vmatpush1.msra.mxu0 %v673
    %698 = vmatprep.subr.mxu0 0.0
    %699 = vmatpush1.msra.mxu0 %v674
    %700 = vmatprep.subr.mxu0 0.0
    %701 = vmatpush1.msra.mxu0 %v675
    %702 = vmatprep.subr.mxu0 0.0
    %703 = vmatpush1.msra.mxu0 %v676
    %704 = vmatprep.subr.mxu0 0.0
    %705 = vmatpush1.msra.mxu0 %v677
    %706 = vmatprep.subr.mxu0 0.0
    %707 = vmatpush1.msra.mxu0 %v678
    %708 = vmatprep.subr.mxu0 0.0
    %709 = vmatpush1.msra.mxu0 %v679
    %710 = vmatprep.subr.mxu0 0.0
    %711 = vmatpush1.msra.mxu0 %v680
    %712 = vmatprep.subr.mxu0 0.0
    %713 = vmatpush1.msra.mxu0 %v681
    %714 = vmatprep.subr.mxu0 0.0
    %715 = vmatpush1.msra.mxu0 0.0
    %716 = vmatprep.subr.mxu0 0.0
    %717 = vmatpush1.msra.mxu0 0.0
    %718 = vmatprep.subr.mxu0 0.0
    %719 = vmatpush1.msra.mxu0 0.0
    %720 = vmatprep.subr.mxu0 0.0
    %721 = vmatpush1.msra.mxu0 0.0
    %722 = vmatprep.subr.mxu0 0.0
    %723 = vmatpush1.msra.mxu0 0.0
    %724 = vmatprep.subr.mxu0 0.0
    %725 = vmatpush1.msra.mxu0 0.0
    %726 = vmatprep.subr.mxu0 0.0
    %727 = vmatpush1.msra.mxu0 0.0
    %728 = vmatprep.subr.mxu0 0.0
    %729 = vmatpush1.msra.mxu0 0.0
    %730 = vmatprep.subr.mxu0 0.0
    %731 = vmatpush1.msra.mxu0 0.0
    %732 = vmatprep.subr.mxu0 0.0
    %733 = vmatpush1.msra.mxu0 0.0
    %734 = vmatprep.subr.mxu0 0.0
    %735 = vmatpush1.msra.mxu0 0.0
    %736 = vmatprep.subr.mxu0 0.0
    %737 = vmatpush1.msra.mxu0 0.0
    %738 = vmatprep.subr.mxu0 0.0
    %739 = vmatpush1.msra.mxu0 0.0
    %740 = vmatprep.subr.mxu0 0.0
    %741 = vmatpush1.msra.mxu0 0.0
    %742 = vmatprep.subr.mxu0 0.0
    %743 = vmatpush1.msra.mxu0 0.0
    %744 = vmatprep.subr.mxu0 0.0
    %745 = vmatpush1.msra.mxu0 0.0
    %746 = vmatprep.mubr.f32.mxu0 0.0
    %747 = vmatmul.mubr.f32.gmra.mrb[0].mxu0 %v621
    %v748 = vpop.f32.mrb[0].mxu0
    %v749 = vadd.f32 0.0, %v748
    %v750 = vpop.f32.mrb[0].mxu0
    %751 = vmatprep.mubr.f32.mxu0 0.0
    %752 = vmatmul.mubr.f32.gmra.mrb[0].mxu0 %v622
    %v753 = vpop.f32.mrb[0].mxu0
    %v754 = vadd.f32 0.0, %v753
    %v755 = vpop.f32.mrb[0].mxu0
    %756 = vmatprep.mubr.f32.mxu0 0.0
    %757 = vmatmul.mubr.f32.gmra.mrb[0].mxu0 %v623
    %v758 = vpop.f32.mrb[0].mxu0
    %v759 = vadd.f32 0.0, %v758
    %v760 = vpop.f32.mrb[0].mxu0
    %761 = vmatprep.mubr.f32.mxu0 0.0
    %762 = vmatmul.mubr.f32.gmra.mrb[0].mxu0 %v624
    %v763 = vpop.f32.mrb[0].mxu0
    %v764 = vadd.f32 0.0, %v763
    %v765 = vpop.f32.mrb[0].mxu0
    %766 = vdwg.mxu0
    %767 = vmatprep.subr.mxu0 0.0
    %768 = vmatpush1.msra.mxu0 %v649
    %769 = vmatprep.subr.mxu0 0.0
    %770 = vmatpush1.msra.mxu0 %v650
    %771 = vmatprep.subr.mxu0 0.0
    %772 = vmatpush1.msra.mxu0 %v651
    %773 = vmatprep.subr.mxu0 0.0
    %774 = vmatpush1.msra.mxu0 %v652
    %775 = vmatprep.subr.mxu0 0.0
    %776 = vmatpush1.msra.mxu0 %v653
    %777 = vmatprep.subr.mxu0 0.0
    %778 = vmatpush1.msra.mxu0 %v654
    %779 = vmatprep.subr.mxu0 0.0
    %780 = vmatpush1.msra.mxu0 %v655
    %781 = vmatprep.subr.mxu0 0.0
    %782 = vmatpush1.msra.mxu0 %v656
    %783 = vmatprep.subr.mxu0 0.0
    %784 = vmatpush1.msra.mxu0 %v657
    %785 = vmatprep.subr.mxu0 0.0
    %786 = vmatpush1.msra.mxu0 %v658
    %787 = vmatprep.subr.mxu0 0.0
    %788 = vmatpush1.msra.mxu0 %v659
    %789 = vmatprep.subr.mxu0 0.0
    %790 = vmatpush1.msra.mxu0 %v660
    %791 = vmatprep.subr.mxu0 0.0
    %792 = vmatpush1.msra.mxu0 %v661
    %793 = vmatprep.subr.mxu0 0.0
    %794 = vmatpush1.msra.mxu0 %v662
    %795 = vmatprep.subr.mxu0 0.0
    %796 = vmatpush1.msra.mxu0 %v663
    %797 = vmatprep.subr.mxu0 0.0
    %798 = vmatpush1.msra.mxu0 %v664
    %799 = vmatprep.subr.mxu0 0.0
    %800 = vmatpush1.msra.mxu0 0.0
    %801 = vmatprep.subr.mxu0 0.0
    %802 = vmatpush1.msra.mxu0 0.0
    %803 = vmatprep.subr.mxu0 0.0
    %804 = vmatpush1.msra.mxu0 0.0
    %805 = vmatprep.subr.mxu0 0.0
    %806 = vmatpush1.msra.mxu0 0.0
    %807 = vmatprep.subr.mxu0 0.0
    %808 = vmatpush1.msra.mxu0 0.0
    %809 = vmatprep.subr.mxu0 0.0
    %810 = vmatpush1.msra.mxu0 0.0
    %811 = vmatprep.subr.mxu0 0.0
    %812 = vmatpush1.msra.mxu0 0.0
    %813 = vmatprep.subr.mxu0 0.0
    %814 = vmatpush1.msra.mxu0 0.0
    %815 = vmatprep.subr.mxu0 0.0
    %816 = vmatpush1.msra.mxu0 0.0
    %817 = vmatprep.subr.mxu0 0.0
    %818 = vmatpush1.msra.mxu0 0.0
    %819 = vmatprep.subr.mxu0 0.0
    %820 = vmatpush1.msra.mxu0 0.0
    %821 = vmatprep.subr.mxu0 0.0
    %822 = vmatpush1.msra.mxu0 0.0
    %823 = vmatprep.subr.mxu0 0.0
    %824 = vmatpush1.msra.mxu0 0.0
    %825 = vmatprep.subr.mxu0 0.0
    %826 = vmatpush1.msra.mxu0 0.0
    %827 = vmatprep.subr.mxu0 0.0
    %828 = vmatpush1.msra.mxu0 0.0
    %829 = vmatprep.subr.mxu0 0.0
    %830 = vmatpush1.msra.mxu0 0.0
    %831 = vmatprep.mubr.f32.mxu0 0.0
    %832 = vmatmul.mubr.f32.gmra.mrb[0].mxu0 %v633
    %v833 = vpop.f32.mrb[0].mxu0
    %v834 = vadd.f32 %v749, %v833
    %v835 = vpop.f32.mrb[0].mxu0
    %836 = vmatprep.mubr.f32.mxu0 0.0
    %837 = vmatmul.mubr.f32.gmra.mrb[0].mxu0 %v634
    %v838 = vpop.f32.mrb[0].mxu0
    %v839 = vadd.f32 %v754, %v838
    %v840 = vpop.f32.mrb[0].mxu0
    %841 = vmatprep.mubr.f32.mxu0 0.0
    %842 = vmatmul.mubr.f32.gmra.mrb[0].mxu0 %v635
    %v843 = vpop.f32.mrb[0].mxu0
    %v844 = vadd.f32 %v759, %v843
    %v845 = vpop.f32.mrb[0].mxu0
    %846 = vmatprep.mubr.f32.mxu0 0.0
    %847 = vmatmul.mubr.f32.gmra.mrb[0].mxu0 %v636
    %v848 = vpop.f32.mrb[0].mxu0
    %v849 = vadd.f32 %v764, %v848
    %v850 = vpop.f32.mrb[0].mxu0
    %851 = vdwg.mxu0
    %s852 = scalar_lea.vmem [#allocation8], 256
    %v853 = vld [vmem:[%s852] sm:$0xff]
    %v854 = vld [vmem:[%s852 + $0x8] sm:$0xff]
    %v855 = vld [vmem:[%s852 + $0x10] sm:$0xff]
    %v856 = vld [vmem:[%s852 + $0x18] sm:$0xff]
    %v857 = vld [vmem:[%s852 + $0x20] sm:$0xff]
    %v858 = vld [vmem:[%s852 + $0x28] sm:$0xff]
    %v859 = vld [vmem:[%s852 + $0x30] sm:$0xff]
    %v860 = vld [vmem:[%s852 + $0x38] sm:$0xff]
    %v861 = vld [vmem:[%s852 + $0x40] sm:$0xff]
    %v862 = vld [vmem:[%s852 + $0x48] sm:$0xff]
    %v863 = vld [vmem:[%s852 + $0x50] sm:$0xff]
    %v864 = vld [vmem:[%s852 + $0x58] sm:$0xff]
    %v865 = vld [vmem:[%s852 + $0x60] sm:$0xff]
    %v866 = vld [vmem:[%s852 + $0x68] sm:$0xff]
    %v867 = vld [vmem:[%s852 + $0x70] sm:$0xff]
    %v868 = vld [vmem:[%s852 + $0x78] sm:$0xff]
    %869 = vmatprep.subr.mxu0 0.0
    %870 = vmatpush1.msra.mxu0 %v853
    %871 = vmatprep.subr.mxu0 0.0
    %872 = vmatpush1.msra.mxu0 %v854
    %873 = vmatprep.subr.mxu0 0.0
    %874 = vmatpush1.msra.mxu0 %v855
    %875 = vmatprep.subr.mxu0 0.0
    %876 = vmatpush1.msra.mxu0 %v856
    %877 = vmatprep.subr.mxu0 0.0
    %878 = vmatpush1.msra.mxu0 %v857
    %879 = vmatprep.subr.mxu0 0.0
    %880 = vmatpush1.msra.mxu0 %v858
    %881 = vmatprep.subr.mxu0 0.0
    %882 = vmatpush1.msra.mxu0 %v859
    %883 = vmatprep.subr.mxu0 0.0
    %884 = vmatpush1.msra.mxu0 %v860
    %885 = vmatprep.subr.mxu0 0.0
    %886 = vmatpush1.msra.mxu0 %v861
    %887 = vmatprep.subr.mxu0 0.0
    %888 = vmatpush1.msra.mxu0 %v862
    %889 = vmatprep.subr.mxu0 0.0
    %890 = vmatpush1.msra.mxu0 %v863
    %891 = vmatprep.subr.mxu0 0.0
    %892 = vmatpush1.msra.mxu0 %v864
    %893 = vmatprep.subr.mxu0 0.0
    %894 = vmatpush1.msra.mxu0 %v865
    %895 = vmatprep.subr.mxu0 0.0
    %896 = vmatpush1.msra.mxu0 %v866
    %897 = vmatprep.subr.mxu0 0.0
    %898 = vmatpush1.msra.mxu0 %v867
    %899 = vmatprep.subr.mxu0 0.0
    %900 = vmatpush1.msra.mxu0 %v868
    %901 = vmatprep.subr.mxu0 0.0
    %902 = vmatpush1.msra.mxu0 0.0
    %903 = vmatprep.subr.mxu0 0.0
    %904 = vmatpush1.msra.mxu0 0.0
    %905 = vmatprep.subr.mxu0 0.0
    %906 = vmatpush1.msra.mxu0 0.0
    %907 = vmatprep.subr.mxu0 0.0
    %908 = vmatpush1.msra.mxu0 0.0
    %909 = vmatprep.subr.mxu0 0.0
    %910 = vmatpush1.msra.mxu0 0.0
    %911 = vmatprep.subr.mxu0 0.0
    %912 = vmatpush1.msra.mxu0 0.0
    %913 = vmatprep.subr.mxu0 0.0
    %914 = vmatpush1.msra.mxu0 0.0
    %915 = vmatprep.subr.mxu0 0.0
    %916 = vmatpush1.msra.mxu0 0.0
    %917 = vmatprep.subr.mxu0 0.0
    %918 = vmatpush1.msra.mxu0 0.0
    %919 = vmatprep.subr.mxu0 0.0
    %920 = vmatpush1.msra.mxu0 0.0
    %921 = vmatprep.subr.mxu0 0.0
    %922 = vmatpush1.msra.mxu0 0.0
    %923 = vmatprep.subr.mxu0 0.0
    %924 = vmatpush1.msra.mxu0 0.0
    %925 = vmatprep.subr.mxu0 0.0
    %926 = vmatpush1.msra.mxu0 0.0
    %927 = vmatprep.subr.mxu0 0.0
    %928 = vmatpush1.msra.mxu0 0.0
    %929 = vmatprep.subr.mxu0 0.0
    %930 = vmatpush1.msra.mxu0 0.0
    %931 = vmatprep.subr.mxu0 0.0
    %932 = vmatpush1.msra.mxu0 0.0
    %933 = vmatprep.mubr.f32.mxu0 0.0
    %934 = vmatmul.mubr.f32.gmra.mrb[0].mxu0 %v645
    %v935 = vpop.f32.mrb[0].mxu0
    %v936 = vadd.f32 0.0, %v935
    %v937 = vpop.f32.mrb[0].mxu0
    %938 = vmatprep.mubr.f32.mxu0 0.0
    %939 = vmatmul.mubr.f32.gmra.mrb[0].mxu0 %v646
    %v940 = vpop.f32.mrb[0].mxu0
    %v941 = vadd.f32 0.0, %v940
    %v942 = vpop.f32.mrb[0].mxu0
    %943 = vmatprep.mubr.f32.mxu0 0.0
    %944 = vmatmul.mubr.f32.gmra.mrb[0].mxu0 %v647
    %v945 = vpop.f32.mrb[0].mxu0
    %v946 = vadd.f32 0.0, %v945
    %v947 = vpop.f32.mrb[0].mxu0
    %948 = vmatprep.mubr.f32.mxu0 0.0
    %949 = vmatmul.mubr.f32.gmra.mrb[0].mxu0 %v648
    %v950 = vpop.f32.mrb[0].mxu0
    %v951 = vadd.f32 0.0, %v950
    %v952 = vpop.f32.mrb[0].mxu0
    %953 = vdwg.mxu0
    %v954 = vadd.f32 %v834, %v936
    %v955 = vadd.f32 %v839, %v941
    %v956 = vadd.f32 %v844, %v946
    %v957 = vadd.f32 %v849, %v951
    %v958 = vld [vmem:[%s4] sm:$0x1]
    %v960 = vlaneseq
    %v961 = vshrl.u32 %v960, 7
    %v962 = vsub.s32 0, %v961
    %v963 = vrot.slane %v958, %v962
    %v965 = vadd.f32 %v954, %v963
    %v966 = vadd.f32 %v955, %v963
    %v967 = vadd.f32 %v956, %v963
    %v968 = vadd.f32 %v957, %v963
    %v969 = vrot.slane %v965, 1
    %v970 = vrot.slane %v966, 1
    %v971 = vrot.slane %v967, 1
    %v972 = vrot.slane %v968, 1
    %v973 = vsel %vm284, %v971, %v972
    %v974 = vsel %vm284, %v970, %v971
    %v975 = vsel %vm284, %v969, %v970
    %v976 = vsel %vm284, %v972, %v969
    %v977 = vrot.slane %v176, 1
    %v978 = vrot.slane %v181, 1
    %v979 = vrot.slane %v186, 1
    %v980 = vrot.slane %v191, 1
    %v981 = vsel %vm284, %v979, %v980
    %v982 = vsel %vm284, %v978, %v979
    %v983 = vsel %vm284, %v977, %v978
    %v984 = vsel %vm284, %v980, %v977
    %v985 = vmax.f32 %v965, %v975
    %v986 = vmax.f32 %v966, %v974
    %v987 = vmax.f32 %v967, %v973
    %v988 = vmax.f32 %v968, %v976
    %v989 = vmax.f32 %v176, %v983
    %v990 = vmax.f32 %v181, %v982
    %v991 = vmax.f32 %v186, %v981
    %v992 = vmax.f32 %v191, %v984
    %v993 = vadd.f32 %v985, %v989
    %v994 = vadd.f32 %v986, %v990
    %v995 = vadd.f32 %v987, %v991
    %v996 = vadd.f32 %v988, %v992
    %997 = vst [vmem:[#allocation2] sm:$0xff] %v993
    %998 = vst [vmem:[#allocation2 + $0x8] sm:$0xff] %v994
    %999 = vst [vmem:[#allocation2 + $0x10] sm:$0xff] %v995
    %1000 = vst [vmem:[#allocation2 + $0x18] sm:$0xff] %v996
    %v1001 = vld [vmem:[#allocation2] ss:$2 sm:$0xff]
    %s1002 = scalar_lea.vmem [#allocation2], 16
    %v1003 = vld [vmem:[%s1002] ss:$2 sm:$0xff]
    %1004 = vst [vmem:[#allocation11] sm:$0xff] %v1001
    %1005 = vst [vmem:[#allocation11 + $0x8] sm:$0xff] %v1003
    // Predicated region
    $region46: #{tpu_custom_call.1} parent=1 // pred_check
      _
    $region47: #{tpu_custom_call.1} parent=1 // pred_check_branch
      %1007 = sbr.rel (0) target = $region49
    $region48: #{tpu_custom_call.1} parent=1 // pred_region
      %s1009 = ssub.s32 256, 256
      %1010 = vsyncadd [#allocation5], %s1009
      %s1011 = sshll.u32 [#allocation11], 4
      %s1012 = int_to_ptr.vmem [resolvable:$true] %s1011
      %1017 = dma.vmem_to_hbm [thread:$0]  %s1012, 256, %s7, [#allocation5], 128, 128, 8
    $region49: #{tpu_custom_call.1} parent=1 // pred_fallthru
      _
    // Predicated region
    $region50: #{tpu_custom_call.1} parent=1 // pred_check
      _
    $region51: #{tpu_custom_call.1} parent=1 // pred_check_branch
      %1019 = sbr.rel (0) target = $region53
    $region52: #{tpu_custom_call.1} parent=1 // pred_region
      %1020 = dma.done [#allocation5], 256
    $region53: #{tpu_custom_call.1} parent=1 // pred_fallthru
      _
    %1021 = vsyncpa [#allocation4], 1
    %1022 = vsyncpa [#allocation7], 1
    %1023 = vsyncpa [#allocation10], 1
    %1024 = vsyncpa [#allocation5], 1

</llo_original>
